<compile_context>
chip_gen: v6e
topology: v6e:2x2x1
jax: 0.10.0
libtpu: 0.0.40
codegen_flags: <defaults>
</compile_context>

<pallas_src>
import functools
import math

import jax
import jax.numpy as jnp
import numpy as np
from jax import lax
from jax.experimental import pallas as pl
from jax.experimental.pallas import tpu as pltpu

EPS = 1e-6  # LlamaRMSNorm default eps


# ---------------------------------------------------------------------------
# helpers
# ---------------------------------------------------------------------------
def _rmsnorm(x, w):
    # x: (rows, H) f32, w: (1, H) f32
    var = jnp.mean(x * x, axis=-1, keepdims=True)
    return x * lax.rsqrt(var + EPS) * w


def _rotate_half_nosign(t, half, head_dim):
    # rotate_half with the sign pattern folded into the host sin table:
    # only the positional half-swap remains.
    if head_dim % 128 == 0:
        # real head dims: XLU lane rotation (free slot, no extra copy)
        return pltpu.roll(t, half, axis=-1)
    # tiny test head dims: lane slice + concat (same permutation)
    return jnp.concatenate([t[:, half:], t[:, :half]], axis=-1)


def _pick_tile(dim, target, align):
    """Largest t <= target with dim % t == 0 and t % align == 0; else the full dim."""
    for cand in range(min(target, dim), 0, -1):
        if dim % cand == 0 and cand % align == 0:
            return cand
    return dim


def _vmem_budget():
    try:
        info = pltpu.get_tpu_info()
        cap = int(getattr(info, "vmem_capacity_bytes", 64 * 1024 * 1024))
    except Exception:
        cap = 64 * 1024 * 1024          # conservative fallback (fits every generation)
    return max(32 * 1024 * 1024, (cap * 3) // 4)   # leave headroom for compiler scratch


# ---------------------------------------------------------------------------
# Kernel A: input RMSNorm + fused per-head QKV projection + RoPE
#   grid (B, S-tiles, heads); head axis innermost ("arbitrary") so the normalized
#   activation scratch computed at h==0 is reused by every head.
# ---------------------------------------------------------------------------
def qkv_kernel(x_ref, wln_ref, wqkv_ref, cq_ref, sq_ref, ck_ref, sk_ref,
               q_ref, k_ref, v_ref, xn_ref, *, head_dim):
    h = pl.program_id(2)

    @pl.when(h == 0)
    def _norm_once():
        x = x_ref[0].astype(jnp.float32)                             # (ts, H)
        xn_ref[...] = _rmsnorm(x, wln_ref[...].astype(jnp.float32)).astype(jnp.bfloat16)

    # fused per-head [Wq|Wk|Wv] projection: bf16 operands, f32 accumulation
    qkv = jnp.dot(xn_ref[...], wqkv_ref[0],
                  preferred_element_type=jnp.float32)                # (ts, 3*hd)
    q = qkv[:, :head_dim]
    k = qkv[:, head_dim:2 * head_dim]
    v = qkv[:, 2 * head_dim:]

    half = head_dim // 2
    # cos_q/sin_q carry the 1/sqrt(hd) scale, sin_q/sin_k carry the rotate_half sign
    q_rot = q * cq_ref[...] + _rotate_half_nosign(q, half, head_dim) * sq_ref[...]
    k_rot = k * ck_ref[...] + _rotate_half_nosign(k, half, head_dim) * sk_ref[...]

    q_ref[0, 0] = q_rot.astype(q_ref.dtype)
    k_ref[0, 0] = k_rot.astype(k_ref.dtype)
    v_ref[0, 0] = v.astype(v_ref.dtype)


# ---------------------------------------------------------------------------
# Kernel B: flash attention, grid (B, heads, q-tiles)
#   K/V (S, hd) blocks stay resident; the KV loop is bounded by the q-tile index so
#   fully-masked tiles are skipped; only the diagonal tile applies the causal mask.
# ---------------------------------------------------------------------------
def flash_kernel(q_ref, k_ref, v_ref, o_ref, *, q_tile):
    qt = pl.program_id(2)
    q = q_ref[0, 0]                                                  # (tq, hd) bf16, pre-scaled
    tq, hd = q.shape

    # hoisted iotas (only the diagonal tile uses them)
    row = lax.broadcasted_iota(jnp.int32, (tq, q_tile), 0)
    col = lax.broadcasted_iota(jnp.int32, (tq, q_tile), 1)

    def block(t, m, l, acc, *, diagonal):
        start = pl.multiple_of(t * q_tile, q_tile)
        kt = k_ref[0, 0, pl.ds(start, q_tile), :]                    # (tk, hd) bf16
        vt = v_ref[0, 0, pl.ds(start, q_tile), :]
        s = lax.dot_general(q, kt, (((1,), (1,)), ((), ())),
                            preferred_element_type=jnp.float32)      # (tq, tk)
        if diagonal:
            s = jnp.where(col <= row, s, jnp.float32(-1e30))
        m_new = jnp.maximum(m, jnp.max(s, axis=-1, keepdims=True))
        alpha = jnp.exp(m - m_new)
        p = jnp.exp(s - m_new)
        l = alpha * l + jnp.sum(p, axis=-1, keepdims=True)
        acc = alpha * acc + jnp.dot(p.astype(jnp.bfloat16), vt,
                                    preferred_element_type=jnp.float32)
        return m_new, l, acc

    m0 = jnp.full((tq, 1), -1e30, jnp.float32)
    l0 = jnp.zeros((tq, 1), jnp.float32)
    a0 = jnp.zeros((tq, hd), jnp.float32)

    # unmasked below-diagonal tiles; above-diagonal tiles are never touched
    m, l, acc = lax.fori_loop(0, qt,
                              lambda t, c: block(t, *c, diagonal=False),
                              (m0, l0, a0))
    # diagonal tile (causal mask)
    m, l, acc = block(qt, m, l, acc, diagonal=True)

    o_ref[0, 0] = (acc * pl.reciprocal(l, approx=True)).astype(o_ref.dtype)


# ---------------------------------------------------------------------------
# Kernel C: output projection (head axis = K reduction over Wo tiles) + residual
# ---------------------------------------------------------------------------
def out_proj_kernel(x_ref, ctx_ref, wo_ref, o_ref, acc_ref):
    h = pl.program_id(2)

    @pl.when(h == 0)
    def _init():
        acc_ref[...] = jnp.zeros_like(acc_ref)

    acc_ref[...] += jnp.dot(ctx_ref[0, 0], wo_ref[...],
                            preferred_element_type=jnp.float32)      # (ts, H)

    @pl.when(h == pl.num_programs(2) - 1)
    def _finalize():
        o_ref[0] = (x_ref[0].astype(jnp.float32) + acc_ref[...]).astype(o_ref.dtype)


# ---------------------------------------------------------------------------
# Kernel D: MLP over flattened (B*S) rows, grid (M-tiles, I-tiles)
# ---------------------------------------------------------------------------
def mlp_kernel(x_ref, wln_ref, wg_ref, wu_ref, wd_ref, o_ref, acc_ref, xn_ref):
    it = pl.program_id(1)

    @pl.when(it == 0)
    def _init():
        x = x_ref[...].astype(jnp.float32)                           # (tm, H)
        xn_ref[...] = _rmsnorm(x, wln_ref[...].astype(jnp.float32)).astype(jnp.bfloat16)
        acc_ref[...] = jnp.zeros_like(acc_ref)

    xn = xn_ref[...]                                                 # bf16, reused per I-tile
    g = jnp.dot(xn, wg_ref[...], preferred_element_type=jnp.float32)  # (tm, tI)
    u = jnp.dot(xn, wu_ref[...], preferred_element_type=jnp.float32)
    hidden = ((g * jax.nn.sigmoid(g)) * u).astype(jnp.bfloat16)      # SiLU(g)*u in f32
    acc_ref[...] += jnp.dot(hidden, wd_ref[...], preferred_element_type=jnp.float32)

    @pl.when(it == pl.num_programs(1) - 1)
    def _finalize():
        o_ref[...] = (x_ref[...].astype(jnp.float32) + acc_ref[...]).astype(o_ref.dtype)


# ---------------------------------------------------------------------------
# Wrapper
# ---------------------------------------------------------------------------
def onoff_llama_decoder_layer(hidden_states, params, *, num_heads, head_dim,
                              pass_mha=False, pass_mlp=False,
                              q_tile=None, i_tile=None, m_tile=None):
    """Forward of OnOff_LlamaDecoderLayer (fresh causal forward).  Returns (hidden_states,)."""
    if pass_mha and pass_mlp:                                        # pass_layer -> identity
        return (hidden_states,)

    B, S, H = hidden_states.shape
    nh, hd = num_heads, head_dim
    assert H == nh * hd

    vmem_cap = _vmem_budget()
    small_vmem = vmem_cap < 64 * 1024 * 1024                          # v7x-class core
    q_t = q_tile if q_tile is not None else 256
    i_t = i_tile if i_tile is not None else (256 if small_vmem else 512)
    m_t = m_tile if m_tile is not None else (128 if small_vmem else 256)

    if not pass_mha:
        ts = _pick_tile(S, q_t, 8)
        n_st = S // ts

        # --- kernel A: RMSNorm + fused per-head QKV + RoPE -> bf16 (B, nh, S, hd) ---
        qkv_fn = pl.pallas_call(
            functools.partial(qkv_kernel, head_dim=hd),
            out_shape=tuple(jax.ShapeDtypeStruct((B, nh, S, hd), jnp.bfloat16)
                            for _ in range(3)),
            grid=(B, n_st, nh),
            in_specs=[
                pl.BlockSpec((1, ts, H), lambda b, st, h: (b, st, 0)),        # hidden_states
                pl.BlockSpec((1, H), lambda b, st, h: (0, 0)),                # input_layernorm
                pl.BlockSpec((1, H, 3 * hd), lambda b, st, h: (h, 0, 0)),     # per-head [Wq|Wk|Wv]
                pl.BlockSpec((ts, hd), lambda b, st, h: (st, 0)),             # cos_q (scale folded)
                pl.BlockSpec((ts, hd), lambda b, st, h: (st, 0)),             # sin_q (sign+scale)
                pl.BlockSpec((ts, hd), lambda b, st, h: (st, 0)),             # cos_k
                pl.BlockSpec((ts, hd), lambda b, st, h: (st, 0)),             # sin_k (sign folded)
            ],
            out_specs=tuple(pl.BlockSpec((1, 1, ts, hd), lambda b, st, h: (b, h, st, 0))
                            for _ in range(3)),
            scratch_shapes=[pltpu.VMEM((ts, H), jnp.bfloat16)],               # xn, reused per head
            compiler_params=pltpu.CompilerParams(
                dimension_semantics=("parallel", "parallel", "arbitrary"),
                vmem_limit_bytes=vmem_cap),
        )
        q, k, v = qkv_fn(hidden_states, params["ln1"], params["wqkv_heads"],
                         params["cos_q"], params["sin_q"],
                         params["cos_k"], params["sin_k"])

        # --- kernel B: flash attention with causal KV-tile skipping ---
        flash_fn = pl.pallas_call(
            functools.partial(flash_kernel, q_tile=ts),
            out_shape=jax.ShapeDtypeStruct((B, nh, S, hd), jnp.bfloat16),
            grid=(B, nh, n_st),
            in_specs=[
                pl.BlockSpec((1, 1, ts, hd), lambda b, h, qt: (b, h, qt, 0)),  # q tile
                pl.BlockSpec((1, 1, S, hd), lambda b, h, qt: (b, h, 0, 0)),    # K (resident)
                pl.BlockSpec((1, 1, S, hd), lambda b, h, qt: (b, h, 0, 0)),    # V (resident)
            ],
            out_specs=pl.BlockSpec((1, 1, ts, hd), lambda b, h, qt: (b, h, qt, 0)),
            compiler_params=pltpu.CompilerParams(
                dimension_semantics=("parallel", "parallel", "parallel"),
                vmem_limit_bytes=vmem_cap),
        )
        ctx = flash_fn(q, k, v)

        # --- kernel C: output projection (K-tiled over heads) + residual ---
        outproj_fn = pl.pallas_call(
            out_proj_kernel,
            out_shape=jax.ShapeDtypeStruct((B, S, H), hidden_states.dtype),
            grid=(B, n_st, nh),
            in_specs=[
                pl.BlockSpec((1, ts, H), lambda b, st, h: (b, st, 0)),         # residual
                pl.BlockSpec((1, 1, ts, hd), lambda b, st, h: (b, h, st, 0)),  # ctx head slice
                pl.BlockSpec((hd, H), lambda b, st, h: (h, 0)),                # Wo K-tile
            ],
            out_specs=pl.BlockSpec((1, ts, H), lambda b, st, h: (b, st, 0)),
            scratch_shapes=[pltpu.VMEM((ts, H), jnp.float32)],
            input_output_aliases={0: 0},                                       # residual in-place
            compiler_params=pltpu.CompilerParams(
                dimension_semantics=("parallel", "parallel", "arbitrary"),
                vmem_limit_bytes=vmem_cap),
        )
        hidden_states = outproj_fn(hidden_states, ctx, params["wo"])

    if not pass_mlp:
        I = params["wg"].shape[1]
        M = B * S
        tm = _pick_tile(M, m_t, 8)
        ti = _pick_tile(I, i_t, 128)
        x2d = hidden_states.reshape(M, H)                                      # flatten (B,S)->M
        mlp_fn = pl.pallas_call(
            mlp_kernel,
            out_shape=jax.ShapeDtypeStruct((M, H), hidden_states.dtype),
            grid=(M // tm, I // ti),
            in_specs=[
                pl.BlockSpec((tm, H), lambda m, i: (m, 0)),                    # rows (resident)
                pl.BlockSpec((1, H), lambda m, i: (0, 0)),                     # post-attn LN
                pl.BlockSpec((H, ti), lambda m, i: (0, i)),                    # Wgate I-tile
                pl.BlockSpec((H, ti), lambda m, i: (0, i)),                    # Wup   I-tile
                pl.BlockSpec((ti, H), lambda m, i: (i, 0)),                    # Wdown I-tile
            ],
            out_specs=pl.BlockSpec((tm, H), lambda m, i: (m, 0)),
            scratch_shapes=[pltpu.VMEM((tm, H), jnp.float32),                  # down-proj acc
                            pltpu.VMEM((tm, H), jnp.bfloat16)],                # normed rows
            input_output_aliases={0: 0},
            compiler_params=pltpu.CompilerParams(
                dimension_semantics=("parallel", "arbitrary"),
                vmem_limit_bytes=vmem_cap),
        )
        hidden_states = mlp_fn(x2d, params["ln2"], params["wg"], params["wu"],
                               params["wd"]).reshape(B, S, H)

    return (hidden_states,)


# ---------------------------------------------------------------------------
# Host-side parameter construction (deterministic)
# ---------------------------------------------------------------------------
def make_params(key, H, I, S, num_heads, head_dim, rope_theta=10000.0):
    ks = jax.random.split(key, 9)
    init = lambda k, shape: (0.02 * jax.random.normal(k, shape)).astype(jnp.float32)
    wq = init(ks[0], (H, H)).astype(jnp.bfloat16)
    wk = init(ks[1], (H, H)).astype(jnp.bfloat16)
    wv = init(ks[2], (H, H)).astype(jnp.bfloat16)

    def per_head(w):                                    # (H, H) -> (nh, H, hd)
        return w.reshape(H, num_heads, head_dim).transpose(1, 0, 2)

    params = {
        "wq": wq, "wk": wk, "wv": wv,                   # reference only
        # kernel layout: per-head interleaved [Wq_h | Wk_h | Wv_h]  -> (nh, H, 3*hd) bf16
        "wqkv_heads": jnp.concatenate([per_head(wq), per_head(wk), per_head(wv)], axis=-1),
        "wo": init(ks[3], (H, H)).astype(jnp.bfloat16),
        "wg": init(ks[4], (H, I)).astype(jnp.bfloat16),
        "wu": init(ks[5], (H, I)).astype(jnp.bfloat16),
        "wd": init(ks[6], (I, H)).astype(jnp.bfloat16),
        "ln1": (1.0 + 0.1 * jax.random.normal(ks[7], (1, H))).astype(jnp.float32),
        "ln2": (1.0 + 0.1 * jax.random.normal(ks[8], (1, H))).astype(jnp.float32),
    }

    # RoPE tables (HF Llama convention emb = cat(freqs, freqs)), per-head sized (S, hd).
    # The rotate_half sign pattern and the 1/sqrt(hd) q-scale are folded in on the host.
    inv_freq = 1.0 / (rope_theta ** (np.arange(0, head_dim, 2, dtype=np.float32) / head_dim))
    pos = np.arange(S, dtype=np.float32)
    freqs = np.outer(pos, inv_freq)                     # (S, hd/2)
    emb = np.concatenate([freqs, freqs], axis=-1)       # (S, hd)
    cos, sin = np.cos(emb), np.sin(emb)
    sign = np.concatenate([-np.ones(head_dim // 2, np.float32),
                           np.ones(head_dim // 2, np.float32)])
    scale = 1.0 / math.sqrt(head_dim)
    params["cos"] = jnp.asarray(cos, jnp.float32)                 # reference
    params["sin"] = jnp.asarray(sin, jnp.float32)                 # reference
    params["cos_q"] = jnp.asarray(cos * scale, jnp.float32)
    params["sin_q"] = jnp.asarray(sin * sign * scale, jnp.float32)
    params["cos_k"] = jnp.asarray(cos, jnp.float32)
    params["sin_k"] = jnp.asarray(sin * sign, jnp.float32)
    return params


# ---------------------------------------------------------------------------
# Pure-JAX reference (f32 math on the same bf16-stored weights)
# ---------------------------------------------------------------------------
def reference(hidden_states, params, num_heads, head_dim):
    f32 = lambda a: a.astype(jnp.float32)

    def rms(t, w):
        var = jnp.mean(t * t, axis=-1, keepdims=True)
        return t * lax.rsqrt(var + EPS) * w

    B, S, H = hidden_states.shape
    half = head_dim // 2
    x = hidden_states

    xn = rms(x, f32(params["ln1"])[0])
    q = xn @ f32(params["wq"])
    k = xn @ f32(params["wk"])
    v = xn @ f32(params["wv"])
    split = lambda t: t.reshape(B, S, num_heads, head_dim).transpose(0, 2, 1, 3)
    qh, kh, vh = split(q), split(k), split(v)
    cos = params["cos"][None, None]
    sin = params["sin"][None, None]
    rot = lambda t: jnp.concatenate([-t[..., half:], t[..., :half]], axis=-1)
    qh = qh * cos + rot(qh) * sin
    kh = kh * cos + rot(kh) * sin
    s = jnp.einsum("bhqd,bhkd->bhqk", qh, kh) / math.sqrt(head_dim)
    mask = jnp.tril(jnp.ones((S, S), bool))
    s = jnp.where(mask, s, -1e30)
    p = jax.nn.softmax(s, axis=-1)
    ctx = jnp.einsum("bhqk,bhkd->bhqd", p, vh).transpose(0, 2, 1, 3).reshape(B, S, H)
    x = x + ctx @ f32(params["wo"])

    xn = rms(x, f32(params["ln2"])[0])
    g = xn @ f32(params["wg"])
    u = xn @ f32(params["wu"])
    x = x + ((g * jax.nn.sigmoid(g)) * u) @ f32(params["wd"])
    return x


if __name__ == "__main__":
    B, S, H = 2, 32, 32
    num_heads, head_dim = 4, 8
    I = 256

    key = jax.random.PRNGKey(0)
    kx, kp = jax.random.split(key)
    hidden_states = jax.random.normal(kx, (B, S, H), jnp.float32)
    params = make_params(kp, H, I, S, num_heads, head_dim)

    # small tile targets so the multi-q-tile (causal skip), multi-M-tile and multi-I-tile
    # paths are all exercised at test shapes
    (out,) = onoff_llama_decoder_layer(
        hidden_states, params, num_heads=num_heads, head_dim=head_dim,
        pass_mha=False, pass_mlp=False, q_tile=8, i_tile=128, m_tile=16)
    out = jax.block_until_ready(out)

    ref = reference(hidden_states, params, num_heads, head_dim)
    assert out.shape == (B, S, H)
    max_err = float(jnp.max(jnp.abs(out - ref)))
    assert jnp.allclose(out, ref, atol=2e-2, rtol=2e-2), \
        f"mismatch vs JAX reference (max abs err {max_err})"

    # MHA-only and MLP-only sub-layer paths
    (out_mha,) = onoff_llama_decoder_layer(
        hidden_states, params, num_heads=num_heads, head_dim=head_dim,
        pass_mlp=True, q_tile=8)
    jax.block_until_ready(out_mha)
    (out_mlp,) = onoff_llama_decoder_layer(
        hidden_states, params, num_heads=num_heads, head_dim=head_dim,
        pass_mha=True, i_tile=128, m_tile=16)
    jax.block_until_ready(out_mlp)

    # pass_layer path (identity)
    (out_skip,) = onoff_llama_decoder_layer(
        hidden_states, params, num_heads=num_heads, head_dim=head_dim,
        pass_mha=True, pass_mlp=True)
    assert jnp.array_equal(jax.block_until_ready(out_skip), hidden_states)

    print("KERNEL_OK")
</pallas_src>

<mosaic_0001>
module attributes {stable_mosaic.version = 11 : i64} {
  func.func @qkv_kernel(%arg0: i32, %arg1: i32, %arg2: i32, %arg3: memref<1x8x32xf32, #tpu.memory_space<vmem>>, %arg4: memref<1x32xf32, #tpu.memory_space<vmem>>, %arg5: memref<1x32x24xbf16, #tpu.memory_space<vmem>>, %arg6: memref<8x8xf32, #tpu.memory_space<vmem>>, %arg7: memref<8x8xf32, #tpu.memory_space<vmem>>, %arg8: memref<8x8xf32, #tpu.memory_space<vmem>>, %arg9: memref<8x8xf32, #tpu.memory_space<vmem>>, %arg10: memref<1x1x8x8xbf16, #tpu.memory_space<vmem>>, %arg11: memref<1x1x8x8xbf16, #tpu.memory_space<vmem>>, %arg12: memref<1x1x8x8xbf16, #tpu.memory_space<vmem>>, %arg13: memref<8x32xbf16, #tpu.memory_space<vmem>>) attributes {dimension_semantics = [#tpu.dimension_semantics<parallel>, #tpu.dimension_semantics<parallel>, #tpu.dimension_semantics<arbitrary>], iteration_bounds = array<i64: 2, 4, 4>, scalar_prefetch = 0 : i64, scratch_operands = 1 : i64, tpu.core_type = #tpu.core_type<tc>, window_params = [{transform_indices = @transform_0, window_bounds = array<i64: 1, 8, 32>}, {pipeline_mode = #tpu.pipeline_mode<synchronous>, transform_indices = @transform_1, window_bounds = array<i64: 1, 32>}, {transform_indices = @transform_2, window_bounds = array<i64: 1, 32, 24>}, {transform_indices = @transform_3, window_bounds = array<i64: 8, 8>}, {transform_indices = @transform_4, window_bounds = array<i64: 8, 8>}, {transform_indices = @transform_5, window_bounds = array<i64: 8, 8>}, {transform_indices = @transform_6, window_bounds = array<i64: 8, 8>}, {transform_indices = @transform_7, window_bounds = array<i64: 1, 1, 8, 8>}, {transform_indices = @transform_8, window_bounds = array<i64: 1, 1, 8, 8>}, {transform_indices = @transform_9, window_bounds = array<i64: 1, 1, 8, 8>}]} {
    %c0_i32 = arith.constant 0 : i32
    %0 = arith.cmpi eq, %arg2, %c0_i32 : i32
    %1 = arith.extui %0 : i1 to i32
    %c0_i32_0 = arith.constant 0 : i32
    %2 = arith.cmpi ne, %1, %c0_i32_0 : i32
    scf.if %2 {
      %c0_25 = arith.constant 0 : index
      %c0_26 = arith.constant 0 : index
      %c0_27 = arith.constant 0 : index
      %38 = vector.load %arg3[%c0_25, %c0_26, %c0_27] : memref<1x8x32xf32, #tpu.memory_space<vmem>>, vector<1x8x32xf32>
      %39 = vector.shape_cast %38 : vector<1x8x32xf32> to vector<8x32xf32>
      %c0_28 = arith.constant 0 : index
      %c0_29 = arith.constant 0 : index
      %40 = vector.load %arg4[%c0_28, %c0_29] : memref<1x32xf32, #tpu.memory_space<vmem>>, vector<1x32xf32>
      %41 = arith.mulf %39, %39 : vector<8x32xf32>
      %cst_30 = arith.constant dense<0.000000e+00> : vector<8xf32>
      %42 = vector.multi_reduction <add>, %41, %cst_30 [1] : vector<8x32xf32> to vector<8xf32>
      %43 = vector.shape_cast %42 : vector<8xf32> to vector<8x1xf32>
      %cst_31 = arith.constant 3.200000e+01 : f32
      %44 = vector.broadcast %cst_31 : f32 to vector<8x1xf32>
      %45 = arith.divf %43, %44 : vector<8x1xf32>
      %cst_32 = arith.constant 9.99999997E-7 : f32
      %46 = vector.broadcast %cst_32 : f32 to vector<8x1xf32>
      %47 = arith.addf %45, %46 : vector<8x1xf32>
      %48 = math.rsqrt %47 : vector<8x1xf32>
      %49 = vector.broadcast %48 : vector<8x1xf32> to vector<8x32xf32>
      %50 = arith.mulf %39, %49 : vector<8x32xf32>
      %51 = vector.broadcast %40 : vector<1x32xf32> to vector<8x32xf32>
      %52 = arith.mulf %50, %51 : vector<8x32xf32>
      %53 = arith.truncf %52 : vector<8x32xf32> to vector<8x32xbf16>
      %c0_33 = arith.constant 0 : index
      %c0_34 = arith.constant 0 : index
      %54 = vector.load %arg13[%c0_33, %c0_34] : memref<8x32xbf16, #tpu.memory_space<vmem>>, vector<8x32xbf16>
      tpu.vector_store %arg13[%c0_33, %c0_34], %53 {strides = array<i32>} : memref<8x32xbf16, #tpu.memory_space<vmem>>, vector<8x32xbf16>,
    } else {
    }
    %c0 = arith.constant 0 : index
    %c0_1 = arith.constant 0 : index
    %3 = vector.load %arg13[%c0, %c0_1] : memref<8x32xbf16, #tpu.memory_space<vmem>>, vector<8x32xbf16>
    %c0_2 = arith.constant 0 : index
    %c0_3 = arith.constant 0 : index
    %c0_4 = arith.constant 0 : index
    %4 = vector.load %arg5[%c0_2, %c0_3, %c0_4] : memref<1x32x24xbf16, #tpu.memory_space<vmem>>, vector<1x32x24xbf16>
    %5 = vector.shape_cast %4 : vector<1x32x24xbf16> to vector<32x24xbf16>
    %cst = arith.constant dense<0.000000e+00> : vector<8x24xf32>
    %6 = tpu.matmul %3, %5, %cst {dimension_numbers = #tpu.dot_dimension_numbers<[1], [0], [0], [1], [0, 0, 1, 1], [], []>} : vector<8x32xbf16>, vector<32x24xbf16>, vector<8x24xf32> -> vector<8x24xf32>
    %7 = vector.extract_strided_slice %6 {offsets = [0, 0], sizes = [8, 8], strides = [1, 1]} : vector<8x24xf32> to vector<8x8xf32>
    %8 = vector.extract_strided_slice %6 {offsets = [0, 8], sizes = [8, 8], strides = [1, 1]} : vector<8x24xf32> to vector<8x8xf32>
    %9 = vector.extract_strided_slice %6 {offsets = [0, 16], sizes = [8, 8], strides = [1, 1]} : vector<8x24xf32> to vector<8x8xf32>
    %c0_5 = arith.constant 0 : index
    %c0_6 = arith.constant 0 : index
    %10 = vector.load %arg6[%c0_5, %c0_6] : memref<8x8xf32, #tpu.memory_space<vmem>>, vector<8x8xf32>
    %11 = arith.mulf %7, %10 : vector<8x8xf32>
    %12 = vector.extract_strided_slice %7 {offsets = [0, 4], sizes = [8, 4], strides = [1, 1]} : vector<8x8xf32> to vector<8x4xf32>
    %13 = vector.extract_strided_slice %7 {offsets = [0, 0], sizes = [8, 4], strides = [1, 1]} : vector<8x8xf32> to vector<8x4xf32>
    %14 = tpu.concatenate %12, %13 in 1 : vector<8x4xf32>, vector<8x4xf32> -> vector<8x8xf32>
    %c0_7 = arith.constant 0 : index
    %c0_8 = arith.constant 0 : index
    %15 = vector.load %arg7[%c0_7, %c0_8] : memref<8x8xf32, #tpu.memory_space<vmem>>, vector<8x8xf32>
    %16 = arith.mulf %14, %15 : vector<8x8xf32>
    %17 = arith.addf %11, %16 : vector<8x8xf32>
    %c0_9 = arith.constant 0 : index
    %c0_10 = arith.constant 0 : index
    %18 = vector.load %arg8[%c0_9, %c0_10] : memref<8x8xf32, #tpu.memory_space<vmem>>, vector<8x8xf32>
    %19 = arith.mulf %8, %18 : vector<8x8xf32>
    %20 = vector.extract_strided_slice %8 {offsets = [0, 4], sizes = [8, 4], strides = [1, 1]} : vector<8x8xf32> to vector<8x4xf32>
    %21 = vector.extract_strided_slice %8 {offsets = [0, 0], sizes = [8, 4], strides = [1, 1]} : vector<8x8xf32> to vector<8x4xf32>
    %22 = tpu.concatenate %20, %21 in 1 : vector<8x4xf32>, vector<8x4xf32> -> vector<8x8xf32>
    %c0_11 = arith.constant 0 : index
    %c0_12 = arith.constant 0 : index
    %23 = vector.load %arg9[%c0_11, %c0_12] : memref<8x8xf32, #tpu.memory_space<vmem>>, vector<8x8xf32>
    %24 = arith.mulf %22, %23 : vector<8x8xf32>
    %25 = arith.addf %19, %24 : vector<8x8xf32>
    %26 = arith.truncf %17 : vector<8x8xf32> to vector<8x8xbf16>
    %c0_13 = arith.constant 0 : index
    %c0_14 = arith.constant 0 : index
    %c0_15 = arith.constant 0 : index
    %c0_16 = arith.constant 0 : index
    %27 = vector.load %arg10[%c0_13, %c0_14, %c0_15, %c0_16] : memref<1x1x8x8xbf16, #tpu.memory_space<vmem>>, vector<1x1x8x8xbf16>
    %28 = vector.shape_cast %27 : vector<1x1x8x8xbf16> to vector<8x8xbf16>
    %29 = vector.shape_cast %26 : vector<8x8xbf16> to vector<1x1x8x8xbf16>
    tpu.vector_store %arg10[%c0_13, %c0_14, %c0_15, %c0_16], %29 {strides = array<i32>} : memref<1x1x8x8xbf16, #tpu.memory_space<vmem>>, vector<1x1x8x8xbf16>,
    %30 = arith.truncf %25 : vector<8x8xf32> to vector<8x8xbf16>
    %c0_17 = arith.constant 0 : index
    %c0_18 = arith.constant 0 : index
    %c0_19 = arith.constant 0 : index
    %c0_20 = arith.constant 0 : index
    %31 = vector.load %arg11[%c0_17, %c0_18, %c0_19, %c0_20] : memref<1x1x8x8xbf16, #tpu.memory_space<vmem>>, vector<1x1x8x8xbf16>
    %32 = vector.shape_cast %31 : vector<1x1x8x8xbf16> to vector<8x8xbf16>
    %33 = vector.shape_cast %30 : vector<8x8xbf16> to vector<1x1x8x8xbf16>
    tpu.vector_store %arg11[%c0_17, %c0_18, %c0_19, %c0_20], %33 {strides = array<i32>} : memref<1x1x8x8xbf16, #tpu.memory_space<vmem>>, vector<1x1x8x8xbf16>,
    %34 = arith.truncf %9 : vector<8x8xf32> to vector<8x8xbf16>
    %c0_21 = arith.constant 0 : index
    %c0_22 = arith.constant 0 : index
    %c0_23 = arith.constant 0 : index
    %c0_24 = arith.constant 0 : index
    %35 = vector.load %arg12[%c0_21, %c0_22, %c0_23, %c0_24] : memref<1x1x8x8xbf16, #tpu.memory_space<vmem>>, vector<1x1x8x8xbf16>
    %36 = vector.shape_cast %35 : vector<1x1x8x8xbf16> to vector<8x8xbf16>
    %37 = vector.shape_cast %34 : vector<8x8xbf16> to vector<1x1x8x8xbf16>
    tpu.vector_store %arg12[%c0_21, %c0_22, %c0_23, %c0_24], %37 {strides = array<i32>} : memref<1x1x8x8xbf16, #tpu.memory_space<vmem>>, vector<1x1x8x8xbf16>,
    return
  }
  func.func @transform_0(%arg0: i32, %arg1: i32, %arg2: i32) -> (i32, i32, i32) {
    %c0_i32 = arith.constant 0 : i32
    %c0_i32_0 = arith.constant 0 : i32
    return %arg0, %arg1, %c0_i32 : i32, i32, i32
  }
  func.func @transform_1(%arg0: i32, %arg1: i32, %arg2: i32) -> (i32, i32) {
    %c0_i32 = arith.constant 0 : i32
    %c0_i32_0 = arith.constant 0 : i32
    %c0_i32_1 = arith.constant 0 : i32
    return %c0_i32, %c0_i32_0 : i32, i32
  }
  func.func @transform_2(%arg0: i32, %arg1: i32, %arg2: i32) -> (i32, i32, i32) {
    %c0_i32 = arith.constant 0 : i32
    %c0_i32_0 = arith.constant 0 : i32
    %c0_i32_1 = arith.constant 0 : i32
    return %arg2, %c0_i32, %c0_i32_0 : i32, i32, i32
  }
  func.func @transform_3(%arg0: i32, %arg1: i32, %arg2: i32) -> (i32, i32) {
    %c0_i32 = arith.constant 0 : i32
    %c0_i32_0 = arith.constant 0 : i32
    return %arg1, %c0_i32 : i32, i32
  }
  func.func @transform_4(%arg0: i32, %arg1: i32, %arg2: i32) -> (i32, i32) {
    %c0_i32 = arith.constant 0 : i32
    %c0_i32_0 = arith.constant 0 : i32
    return %arg1, %c0_i32 : i32, i32
  }
  func.func @transform_5(%arg0: i32, %arg1: i32, %arg2: i32) -> (i32, i32) {
    %c0_i32 = arith.constant 0 : i32
    %c0_i32_0 = arith.constant 0 : i32
    return %arg1, %c0_i32 : i32, i32
  }
  func.func @transform_6(%arg0: i32, %arg1: i32, %arg2: i32) -> (i32, i32) {
    %c0_i32 = arith.constant 0 : i32
    %c0_i32_0 = arith.constant 0 : i32
    return %arg1, %c0_i32 : i32, i32
  }
  func.func @transform_7(%arg0: i32, %arg1: i32, %arg2: i32) -> (i32, i32, i32, i32) {
    %c0_i32 = arith.constant 0 : i32
    %c0_i32_0 = arith.constant 0 : i32
    return %arg0, %arg2, %arg1, %c0_i32 : i32, i32, i32, i32
  }
  func.func @transform_8(%arg0: i32, %arg1: i32, %arg2: i32) -> (i32, i32, i32, i32) {
    %c0_i32 = arith.constant 0 : i32
    %c0_i32_0 = arith.constant 0 : i32
    return %arg0, %arg2, %arg1, %c0_i32 : i32, i32, i32, i32
  }
  func.func @transform_9(%arg0: i32, %arg1: i32, %arg2: i32) -> (i32, i32, i32, i32) {
    %c0_i32 = arith.constant 0 : i32
    %c0_i32_0 = arith.constant 0 : i32
    return %arg0, %arg2, %arg1, %c0_i32 : i32, i32, i32, i32
  }
}

</mosaic_0001>

<llo_original>
// kernel: tpu_custom_call.1
$region0: #{tpu_custom_call.1}
  #allocation0 [shape = 'u32[]', space=smem, size = 0x4, offset = 0x4, fixed_abs, tag = 'smem constant byte address 0x4 - core index']
  #allocation1 [shape = 'u32[144,128]{1,0:T(1,128)}', space=vmem, size = 0x12000, scoped, tag = 'internal scratch']
  #allocation2 [shape = 'bf16[8,32]{1,0:T(8,128)(2,1)}', space=vmem, size = 0x800, scoped, tag = 'scratch operand']
  %s0 = inlined_call_operand.vmem [shape: f32[2,32,32], index: 0, kind: input, shape index: {}]
  %s1 = inlined_call_operand.vmem [shape: f32[1,32], index: 1, kind: input, shape index: {}]
  %s2 = inlined_call_operand.vmem [shape: bf16[4,32,24], index: 2, kind: input, shape index: {}]
  %s3 = inlined_call_operand.vmem [shape: f32[32,8], index: 3, kind: input, shape index: {}]
  %s4 = inlined_call_operand.vmem [shape: f32[32,8], index: 4, kind: input, shape index: {}]
  %s5 = inlined_call_operand.vmem [shape: f32[32,8], index: 5, kind: input, shape index: {}]
  %s6 = inlined_call_operand.vmem [shape: f32[32,8], index: 6, kind: input, shape index: {}]
  %s7 = inlined_call_operand.vmem [shape: bf16[2,4,32,8], index: 7, kind: output, shape index: {0}]
  %s8 = inlined_call_operand.vmem [shape: bf16[2,4,32,8], index: 8, kind: output, shape index: {1}]
  %s9 = inlined_call_operand.vmem [shape: bf16[2,4,32,8], index: 9, kind: output, shape index: {2}]
  %10 = xla_tuple %s7, %s8, %s9
  %s11 = sld [smem:[#allocation0]]
  $region81: #{tpu_custom_call.1} parent=0
    _
  %s13 = ssub.s32 1, %s11
  %s14 = scalar_select 0, %s13, %s11
  loop: start=0, step=1, limit=34
  $region2: #{tpu_custom_call.1} parent=0 // loop_pre_header
    _
  $region3: #{tpu_custom_call.1} parent=0 // loop_header
    %s16 = sphi 0, %s20
    %p17 = scmp.ge.s32.totalorder %s16, 34
    %s23 = sphi 0, %s42
    %s24 = sphi 0, %s38
    %s25 = sphi 0, %s34
    %s26 = sphi 0, %s23
    %s27 = sphi 0, %s24
    %s28 = sphi 0, %s25
    %s29 = sphi 0, %s26
    %s30 = sphi 0, %s27
    %s31 = sphi 0, %s28
    %s47 = sphi 0, %s49
    %s50 = sphi 0, %s47
    %s51 = sphi 0, %s50
    %s67 = sphi 0, %s51
    %s71 = sphi 0, %s71
    %s73 = sphi 0, %s71
    %s74 = sphi 0, %s73
    %s88 = sphi 0, %s74
    %s94 = sphi 0, %s96
    %s97 = sphi 0, %s94
    %s98 = sphi 0, %s97
    %s114 = sphi 0, %s98
    %s120 = sphi 0, %s122
    %s123 = sphi 0, %s120
    %s124 = sphi 0, %s123
    %s140 = sphi 0, %s124
    %s146 = sphi 0, %s148
    %s149 = sphi 0, %s146
    %s150 = sphi 0, %s149
    %s166 = sphi 0, %s150
    %s172 = sphi 0, %s174
    %s175 = sphi 0, %s172
    %s176 = sphi 0, %s175
    %s192 = sphi 0, %s176
    %s198 = sphi 0, %s200
    %s201 = sphi 0, %s198
    %s202 = sphi 0, %s201
    %s218 = sphi 0, %s202
    %s228 = sphi 0, %s230
    %s231 = sphi 0, %s228
    %s232 = sphi 0, %s231
    %s248 = sphi 0, %s232
    %s258 = sphi 0, %s260
    %s261 = sphi 0, %s258
    %s262 = sphi 0, %s261
    %s278 = sphi 0, %s262
    %s288 = sphi 0, %s290
    %s291 = sphi 0, %s288
    %s292 = sphi 0, %s291
    %s308 = sphi 0, %s292
  $region4: #{tpu_custom_call.1} parent=0 // loop_header_branch
    %19 = sbr.rel (%p17) target = $region8
  $region5: #{tpu_custom_call.1} parent=0 // loop_body
    %s21 = ssub.s32 %s16, 1
    %s22 = ssub.s32 %s16, 2
    %s32 = sadd.s32 1, %s25
    %p33 = scmp.ge.s32.totalorder %s32, 4
    %s34 = scalar_select %p33, 0, %s32
    %s35 = sadd.s32 1, %s24
    %s36 = scalar_select %p33, %s35, %s24
    %p37 = scmp.ge.s32.totalorder %s36, 4
    %s38 = scalar_select %p37, 0, %s36
    %s39 = sadd.s32 1, %s23
    %s40 = scalar_select %p37, %s39, %s23
    %p41 = scmp.ge.s32.totalorder %s40, 2
    %s42 = scalar_select %p41, 0, %s40
    %s43 = ssub.s32 %s23, %s42
    %s44 = ssub.s32 %s24, %s38
    %s45 = sor.u32 %s43, %s44
    %p46 = scmp.eq.s32.totalorder %s45, 0
    %s48 = sadd.s32 %s47, 1
    %s49 = scalar_select %p46, %s47, %s48
    %p52 = pneg %p46
    %p53 = scmp.eq.s32.totalorder %s16, 31
    %p54 = por %p52, %p53
    %p55 = scmp.ne.s32.totalorder %s47, %s50
    %p56 = scmp.eq.s32.totalorder %s16, 0
    %p57 = por %p55, %p56
    %p58 = scmp.ne.s32.totalorder %s47, %s50
    %p59 = scmp.eq.s32.totalorder %s21, 31
    %p60 = por %p58, %p59
    %p61 = scmp.ne.s32.totalorder %s50, %s51
    %p62 = scmp.eq.s32.totalorder %s21, 0
    %p63 = por %p61, %p62
    %p64 = scmp.ne.s32.totalorder %s50, %s51
    %p65 = scmp.eq.s32.totalorder %s22, 31
    %p66 = por %p64, %p65
    %p68 = scmp.ne.s32.totalorder %s51, %s67
    %p69 = scmp.eq.s32.totalorder %s22, 0
    %p70 = por %p68, %p69
    %s72 = sadd.s32 %s71, 1
    %p75 = scmp.eq.s32.totalorder %s16, 31
    %p76 = scmp.ne.s32.totalorder %s71, %s73
    %p77 = scmp.eq.s32.totalorder %s16, 0
    %p78 = por %p76, %p77
    %p79 = scmp.ne.s32.totalorder %s71, %s73
    %p80 = scmp.eq.s32.totalorder %s21, 31
    %p81 = por %p79, %p80
    %p82 = scmp.ne.s32.totalorder %s73, %s74
    %p83 = scmp.eq.s32.totalorder %s21, 0
    %p84 = por %p82, %p83
    %p85 = scmp.ne.s32.totalorder %s73, %s74
    %p86 = scmp.eq.s32.totalorder %s22, 31
    %p87 = por %p85, %p86
    %p89 = scmp.ne.s32.totalorder %s74, %s88
    %p90 = scmp.eq.s32.totalorder %s22, 0
    %p91 = por %p89, %p90
    %s92 = ssub.s32 %s25, %s34
    %p93 = scmp.eq.s32.totalorder %s92, 0
    %s95 = sadd.s32 %s94, 1
    %s96 = scalar_select %p93, %s94, %s95
    %p99 = pneg %p93
    %p100 = scmp.eq.s32.totalorder %s16, 31
    %p101 = por %p99, %p100
    %p102 = scmp.ne.s32.totalorder %s94, %s97
    %p103 = scmp.eq.s32.totalorder %s16, 0
    %p104 = por %p102, %p103
    %p105 = scmp.ne.s32.totalorder %s94, %s97
    %p106 = scmp.eq.s32.totalorder %s21, 31
    %p107 = por %p105, %p106
    %p108 = scmp.ne.s32.totalorder %s97, %s98
    %p109 = scmp.eq.s32.totalorder %s21, 0
    %p110 = por %p108, %p109
    %p111 = scmp.ne.s32.totalorder %s97, %s98
    %p112 = scmp.eq.s32.totalorder %s22, 31
    %p113 = por %p111, %p112
    %p115 = scmp.ne.s32.totalorder %s98, %s114
    %p116 = scmp.eq.s32.totalorder %s22, 0
    %p117 = por %p115, %p116
    %s118 = ssub.s32 %s24, %s38
    %p119 = scmp.eq.s32.totalorder %s118, 0
    %s121 = sadd.s32 %s120, 1
    %s122 = scalar_select %p119, %s120, %s121
    %p125 = pneg %p119
    %p126 = scmp.eq.s32.totalorder %s16, 31
    %p127 = por %p125, %p126
    %p128 = scmp.ne.s32.totalorder %s120, %s123
    %p129 = scmp.eq.s32.totalorder %s16, 0
    %p130 = por %p128, %p129
    %p131 = scmp.ne.s32.totalorder %s120, %s123
    %p132 = scmp.eq.s32.totalorder %s21, 31
    %p133 = por %p131, %p132
    %p134 = scmp.ne.s32.totalorder %s123, %s124
    %p135 = scmp.eq.s32.totalorder %s21, 0
    %p136 = por %p134, %p135
    %p137 = scmp.ne.s32.totalorder %s123, %s124
    %p138 = scmp.eq.s32.totalorder %s22, 31
    %p139 = por %p137, %p138
    %p141 = scmp.ne.s32.totalorder %s124, %s140
    %p142 = scmp.eq.s32.totalorder %s22, 0
    %p143 = por %p141, %p142
    %s144 = ssub.s32 %s24, %s38
    %p145 = scmp.eq.s32.totalorder %s144, 0
    %s147 = sadd.s32 %s146, 1
    %s148 = scalar_select %p145, %s146, %s147
    %p151 = pneg %p145
    %p152 = scmp.eq.s32.totalorder %s16, 31
    %p153 = por %p151, %p152
    %p154 = scmp.ne.s32.totalorder %s146, %s149
    %p155 = scmp.eq.s32.totalorder %s16, 0
    %p156 = por %p154, %p155
    %p157 = scmp.ne.s32.totalorder %s146, %s149
    %p158 = scmp.eq.s32.totalorder %s21, 31
    %p159 = por %p157, %p158
    %p160 = scmp.ne.s32.totalorder %s149, %s150
    %p161 = scmp.eq.s32.totalorder %s21, 0
    %p162 = por %p160, %p161
    %p163 = scmp.ne.s32.totalorder %s149, %s150
    %p164 = scmp.eq.s32.totalorder %s22, 31
    %p165 = por %p163, %p164
    %p167 = scmp.ne.s32.totalorder %s150, %s166
    %p168 = scmp.eq.s32.totalorder %s22, 0
    %p169 = por %p167, %p168
    %s170 = ssub.s32 %s24, %s38
    %p171 = scmp.eq.s32.totalorder %s170, 0
    %s173 = sadd.s32 %s172, 1
    %s174 = scalar_select %p171, %s172, %s173
    %p177 = pneg %p171
    %p178 = scmp.eq.s32.totalorder %s16, 31
    %p179 = por %p177, %p178
    %p180 = scmp.ne.s32.totalorder %s172, %s175
    %p181 = scmp.eq.s32.totalorder %s16, 0
    %p182 = por %p180, %p181
    %p183 = scmp.ne.s32.totalorder %s172, %s175
    %p184 = scmp.eq.s32.totalorder %s21, 31
    %p185 = por %p183, %p184
    %p186 = scmp.ne.s32.totalorder %s175, %s176
    %p187 = scmp.eq.s32.totalorder %s21, 0
    %p188 = por %p186, %p187
    %p189 = scmp.ne.s32.totalorder %s175, %s176
    %p190 = scmp.eq.s32.totalorder %s22, 31
    %p191 = por %p189, %p190
    %p193 = scmp.ne.s32.totalorder %s176, %s192
    %p194 = scmp.eq.s32.totalorder %s22, 0
    %p195 = por %p193, %p194
    %s196 = ssub.s32 %s24, %s38
    %p197 = scmp.eq.s32.totalorder %s196, 0
    %s199 = sadd.s32 %s198, 1
    %s200 = scalar_select %p197, %s198, %s199
    %p203 = pneg %p197
    %p204 = scmp.eq.s32.totalorder %s16, 31
    %p205 = por %p203, %p204
    %p206 = scmp.ne.s32.totalorder %s198, %s201
    %p207 = scmp.eq.s32.totalorder %s16, 0
    %p208 = por %p206, %p207
    %p209 = scmp.ne.s32.totalorder %s198, %s201
    %p210 = scmp.eq.s32.totalorder %s21, 31
    %p211 = por %p209, %p210
    %p212 = scmp.ne.s32.totalorder %s201, %s202
    %p213 = scmp.eq.s32.totalorder %s21, 0
    %p214 = por %p212, %p213
    %p215 = scmp.ne.s32.totalorder %s201, %s202
    %p216 = scmp.eq.s32.totalorder %s22, 31
    %p217 = por %p215, %p216
    %p219 = scmp.ne.s32.totalorder %s202, %s218
    %p220 = scmp.eq.s32.totalorder %s22, 0
    %p221 = por %p219, %p220
    %s222 = ssub.s32 %s23, %s42
    %s223 = ssub.s32 %s25, %s34
    %s224 = sor.u32 %s222, %s223
    %s225 = ssub.s32 %s24, %s38
    %s226 = sor.u32 %s224, %s225
    %p227 = scmp.eq.s32.totalorder %s226, 0
    %s229 = sadd.s32 %s228, 1
    %s230 = scalar_select %p227, %s228, %s229
    %p233 = pneg %p227
    %p234 = scmp.eq.s32.totalorder %s16, 31
    %p235 = por %p233, %p234
    %p236 = scmp.ne.s32.totalorder %s228, %s231
    %p237 = scmp.eq.s32.totalorder %s16, 0
    %p238 = por %p236, %p237
    %p239 = scmp.ne.s32.totalorder %s228, %s231
    %p240 = scmp.eq.s32.totalorder %s21, 31
    %p241 = por %p239, %p240
    %p242 = scmp.ne.s32.totalorder %s231, %s232
    %p243 = scmp.eq.s32.totalorder %s21, 0
    %p244 = por %p242, %p243
    %p245 = scmp.ne.s32.totalorder %s231, %s232
    %p246 = scmp.eq.s32.totalorder %s22, 31
    %p247 = por %p245, %p246
    %p249 = scmp.ne.s32.totalorder %s232, %s248
    %p250 = scmp.eq.s32.totalorder %s22, 0
    %p251 = por %p249, %p250
    %s252 = ssub.s32 %s23, %s42
    %s253 = ssub.s32 %s25, %s34
    %s254 = sor.u32 %s252, %s253
    %s255 = ssub.s32 %s24, %s38
    %s256 = sor.u32 %s254, %s255
    %p257 = scmp.eq.s32.totalorder %s256, 0
    %s259 = sadd.s32 %s258, 1
    %s260 = scalar_select %p257, %s258, %s259
    %p263 = pneg %p257
    %p264 = scmp.eq.s32.totalorder %s16, 31
    %p265 = por %p263, %p264
    %p266 = scmp.ne.s32.totalorder %s258, %s261
    %p267 = scmp.eq.s32.totalorder %s16, 0
    %p268 = por %p266, %p267
    %p269 = scmp.ne.s32.totalorder %s258, %s261
    %p270 = scmp.eq.s32.totalorder %s21, 31
    %p271 = por %p269, %p270
    %p272 = scmp.ne.s32.totalorder %s261, %s262
    %p273 = scmp.eq.s32.totalorder %s21, 0
    %p274 = por %p272, %p273
    %p275 = scmp.ne.s32.totalorder %s261, %s262
    %p276 = scmp.eq.s32.totalorder %s22, 31
    %p277 = por %p275, %p276
    %p279 = scmp.ne.s32.totalorder %s262, %s278
    %p280 = scmp.eq.s32.totalorder %s22, 0
    %p281 = por %p279, %p280
    %s282 = ssub.s32 %s23, %s42
    %s283 = ssub.s32 %s25, %s34
    %s284 = sor.u32 %s282, %s283
    %s285 = ssub.s32 %s24, %s38
    %s286 = sor.u32 %s284, %s285
    %p287 = scmp.eq.s32.totalorder %s286, 0
    %s289 = sadd.s32 %s288, 1
    %s290 = scalar_select %p287, %s288, %s289
    %p293 = pneg %p287
    %p294 = scmp.eq.s32.totalorder %s16, 31
    %p295 = por %p293, %p294
    %p296 = scmp.ne.s32.totalorder %s288, %s291
    %p297 = scmp.eq.s32.totalorder %s16, 0
    %p298 = por %p296, %p297
    %p299 = scmp.ne.s32.totalorder %s288, %s291
    %p300 = scmp.eq.s32.totalorder %s21, 31
    %p301 = por %p299, %p300
    %p302 = scmp.ne.s32.totalorder %s291, %s292
    %p303 = scmp.eq.s32.totalorder %s21, 0
    %p304 = por %p302, %p303
    %p305 = scmp.ne.s32.totalorder %s291, %s292
    %p306 = scmp.eq.s32.totalorder %s22, 31
    %p307 = por %p305, %p306
    %p309 = scmp.ne.s32.totalorder %s292, %s308
    %p310 = scmp.eq.s32.totalorder %s22, 0
    %p311 = por %p309, %p310
    %p312 = scmp.le.s32.totalorder 1, %s16
    %p313 = scmp.lt.s32.totalorder %s16, 33
    %p314 = pnand %p312, %p313
    %p315 = pneg %p314
    // Predicated region
    $region9: #{tpu_custom_call.1} parent=5 // pred_check
      _
    $region10: #{tpu_custom_call.1} parent=5 // pred_check_branch
      %317 = sbr.rel (%p314) target = $region12
    $region11: #{tpu_custom_call.1} parent=5 // pred_region
      %s318 = ssub.s32 %s16, 1
      // Predicated region
      $region13: #{tpu_custom_call.1} parent=11 // pred_check
        %p319 = pneg %p84
      $region14: #{tpu_custom_call.1} parent=11 // pred_check_branch
        %321 = sbr.rel (%p319) target = $region16
      $region15: #{tpu_custom_call.1} parent=11 // pred_region
        _
      $region16: #{tpu_custom_call.1} parent=11 // pred_fallthru
        _
    $region12: #{tpu_custom_call.1} parent=5 // pred_fallthru
      _
    %p322 = scmp.lt.s32.totalorder %s16, 32
    // Predicated region
    $region17: #{tpu_custom_call.1} parent=5 // pred_check
      %p323 = pneg %p322
    $region18: #{tpu_custom_call.1} parent=5 // pred_check_branch
      %325 = sbr.rel (%p323) target = $region20
    $region19: #{tpu_custom_call.1} parent=5 // pred_region
      // Predicated region
      $region21: #{tpu_custom_call.1} parent=19 // pred_check
        %p326 = pneg %p57
      $region22: #{tpu_custom_call.1} parent=19 // pred_check_branch
        %328 = sbr.rel (%p326) target = $region24
      $region23: #{tpu_custom_call.1} parent=19 // pred_region
        %p329 = scmp.lt.s32.totalorder %s23, 1
        %s330 = scalar_select %p329, %s23, 1
        %p331 = scmp.lt.s32.totalorder %s24, 3
        %s332 = scalar_select %p331, %s24, 3
        %s333 = smul.addr %s330, 4
        %s334 = sadd.s32 %s332, %s333
        %s335 = smul.addr %s334, 8
        %s336 = scalar_lea.vmem %s0, %s335
      $region24: #{tpu_custom_call.1} parent=19 // pred_fallthru
        _
      // Predicated region
      $region25: #{tpu_custom_call.1} parent=19 // pred_check
        %p337 = pneg %p104
      $region26: #{tpu_custom_call.1} parent=19 // pred_check_branch
        %339 = sbr.rel (%p337) target = $region28
      $region27: #{tpu_custom_call.1} parent=19 // pred_region
        %p340 = scmp.lt.s32.totalorder %s25, 3
        %s341 = scalar_select %p340, %s25, 3
        %s342 = smul.addr %s341, 4
        %s343 = smul.addr %s342, 4
        %s344 = scalar_lea.vmem %s2, %s343
      $region28: #{tpu_custom_call.1} parent=19 // pred_fallthru
        _
      // Predicated region
      $region29: #{tpu_custom_call.1} parent=19 // pred_check
        %p345 = pneg %p130
      $region30: #{tpu_custom_call.1} parent=19 // pred_check_branch
        %347 = sbr.rel (%p345) target = $region32
      $region31: #{tpu_custom_call.1} parent=19 // pred_region
        %p348 = scmp.lt.s32.totalorder %s24, 3
        %s349 = scalar_select %p348, %s24, 3
        %s350 = smul.addr %s349, 8
        %s351 = scalar_lea.vmem %s3, %s350
      $region32: #{tpu_custom_call.1} parent=19 // pred_fallthru
        _
      // Predicated region
      $region33: #{tpu_custom_call.1} parent=19 // pred_check
        %p352 = pneg %p156
      $region34: #{tpu_custom_call.1} parent=19 // pred_check_branch
        %354 = sbr.rel (%p352) target = $region36
      $region35: #{tpu_custom_call.1} parent=19 // pred_region
        %p355 = scmp.lt.s32.totalorder %s24, 3
        %s356 = scalar_select %p355, %s24, 3
        %s357 = smul.addr %s356, 8
        %s358 = scalar_lea.vmem %s4, %s357
      $region36: #{tpu_custom_call.1} parent=19 // pred_fallthru
        _
      // Predicated region
      $region37: #{tpu_custom_call.1} parent=19 // pred_check
        %p359 = pneg %p182
      $region38: #{tpu_custom_call.1} parent=19 // pred_check_branch
        %361 = sbr.rel (%p359) target = $region40
      $region39: #{tpu_custom_call.1} parent=19 // pred_region
        %p362 = scmp.lt.s32.totalorder %s24, 3
        %s363 = scalar_select %p362, %s24, 3
        %s364 = smul.addr %s363, 8
        %s365 = scalar_lea.vmem %s5, %s364
      $region40: #{tpu_custom_call.1} parent=19 // pred_fallthru
        _
      // Predicated region
      $region41: #{tpu_custom_call.1} parent=19 // pred_check
        %p366 = pneg %p208
      $region42: #{tpu_custom_call.1} parent=19 // pred_check_branch
        %368 = sbr.rel (%p366) target = $region44
      $region43: #{tpu_custom_call.1} parent=19 // pred_region
        %p369 = scmp.lt.s32.totalorder %s24, 3
        %s370 = scalar_select %p369, %s24, 3
        %s371 = smul.addr %s370, 8
        %s372 = scalar_lea.vmem %s6, %s371
      $region44: #{tpu_custom_call.1} parent=19 // pred_fallthru
        _
    $region20: #{tpu_custom_call.1} parent=5 // pred_fallthru
      _
    %p373 = scmp.le.s32.totalorder 1, %s16
    %p374 = scmp.lt.s32.totalorder %s16, 33
    %p375 = pnand %p373, %p374
    %p376 = pneg %p375
    // Predicated region
    $region45: #{tpu_custom_call.1} parent=5 // pred_check
      _
    $region46: #{tpu_custom_call.1} parent=5 // pred_check_branch
      %378 = sbr.rel (%p375) target = $region48
    $region47: #{tpu_custom_call.1} parent=5 // pred_region
      %s379 = ssub.s32 %s16, 1
      %p380 = scmp.lt.s32.totalorder %s26, 1
      %s381 = scalar_select %p380, %s26, 1
      %p382 = scmp.lt.s32.totalorder %s27, 3
      %s383 = scalar_select %p382, %s27, 3
      %s384 = smul.addr %s381, 4
      %s385 = sadd.s32 %s383, %s384
      %s386 = smul.addr %s385, 8
      %s387 = scalar_lea.vmem %s0, %s386
      %p388 = pneg %p63
      %p389 = pneg %p60
      %p390 = pneg %p84
      %p391 = pneg %p81
      %p392 = scmp.lt.s32.totalorder %s28, 3
      %s393 = scalar_select %p392, %s28, 3
      %s394 = smul.addr %s393, 4
      %s395 = smul.addr %s394, 4
      %s396 = scalar_lea.vmem %s2, %s395
      %p397 = pneg %p110
      %p398 = pneg %p107
      %p399 = scmp.lt.s32.totalorder %s27, 3
      %s400 = scalar_select %p399, %s27, 3
      %s401 = smul.addr %s400, 8
      %s402 = scalar_lea.vmem %s3, %s401
      %p403 = pneg %p136
      %p404 = pneg %p133
      %p405 = scmp.lt.s32.totalorder %s27, 3
      %s406 = scalar_select %p405, %s27, 3
      %s407 = smul.addr %s406, 8
      %s408 = scalar_lea.vmem %s4, %s407
      %p409 = pneg %p162
      %p410 = pneg %p159
      %p411 = scmp.lt.s32.totalorder %s27, 3
      %s412 = scalar_select %p411, %s27, 3
      %s413 = smul.addr %s412, 8
      %s414 = scalar_lea.vmem %s5, %s413
      %p415 = pneg %p188
      %p416 = pneg %p185
      %p417 = scmp.lt.s32.totalorder %s27, 3
      %s418 = scalar_select %p417, %s27, 3
      %s419 = smul.addr %s418, 8
      %s420 = scalar_lea.vmem %s6, %s419
      %p421 = pneg %p214
      %p422 = pneg %p211
      %p423 = pneg %p244
      %p424 = pneg %p241
      %p425 = scmp.lt.s32.totalorder %s26, 1
      %s426 = scalar_select %p425, %s26, 1
      %p427 = scmp.lt.s32.totalorder %s28, 3
      %s428 = scalar_select %p427, %s28, 3
      %p429 = scmp.lt.s32.totalorder %s27, 3
      %s430 = scalar_select %p429, %s27, 3
      %s431 = smul.addr %s428, 4
      %s432 = sadd.s32 %s430, %s431
      %s433 = smul.addr %s426, 16
      %s434 = sadd.s32 %s432, %s433
      %s435 = smul.addr %s434, 4
      %s436 = scalar_lea.vmem %s7, %s435
      %p437 = pneg %p274
      %p438 = pneg %p271
      %p439 = scmp.lt.s32.totalorder %s26, 1
      %s440 = scalar_select %p439, %s26, 1
      %p441 = scmp.lt.s32.totalorder %s28, 3
      %s442 = scalar_select %p441, %s28, 3
      %p443 = scmp.lt.s32.totalorder %s27, 3
      %s444 = scalar_select %p443, %s27, 3
      %s445 = smul.addr %s442, 4
      %s446 = sadd.s32 %s444, %s445
      %s447 = smul.addr %s440, 16
      %s448 = sadd.s32 %s446, %s447
      %s449 = smul.addr %s448, 4
      %s450 = scalar_lea.vmem %s8, %s449
      %p451 = pneg %p304
      %p452 = pneg %p301
      %p453 = scmp.lt.s32.totalorder %s26, 1
      %s454 = scalar_select %p453, %s26, 1
      %p455 = scmp.lt.s32.totalorder %s28, 3
      %s456 = scalar_select %p455, %s28, 3
      %p457 = scmp.lt.s32.totalorder %s27, 3
      %s458 = scalar_select %p457, %s27, 3
      %s459 = smul.addr %s456, 4
      %s460 = sadd.s32 %s458, %s459
      %s461 = smul.addr %s454, 16
      %s462 = sadd.s32 %s460, %s461
      %s463 = smul.addr %s462, 4
      %s464 = scalar_lea.vmem %s9, %s463
      %p465 = scmp.lt.s32.totalorder %s26, 1
      %s466 = scalar_select %p465, %s26, 1
      %p467 = scmp.lt.s32.totalorder %s27, 3
      %s468 = scalar_select %p467, %s27, 3
      %s469 = smul.addr %s466, 4
      %s470 = sadd.s32 %s468, %s469
      %s471 = smul.addr %s470, 8
      %s472 = scalar_lea.vmem %s0, %s471
      %p473 = scmp.lt.s32.totalorder %s28, 3
      %s474 = scalar_select %p473, %s28, 3
      %s475 = smul.addr %s474, 4
      %s476 = smul.addr %s475, 4
      %s477 = scalar_lea.vmem %s2, %s476
      %p478 = scmp.lt.s32.totalorder %s27, 3
      %s479 = scalar_select %p478, %s27, 3
      %s480 = smul.addr %s479, 8
      %s481 = scalar_lea.vmem %s3, %s480
      %p482 = scmp.lt.s32.totalorder %s27, 3
      %s483 = scalar_select %p482, %s27, 3
      %s484 = smul.addr %s483, 8
      %s485 = scalar_lea.vmem %s4, %s484
      %p486 = scmp.lt.s32.totalorder %s27, 3
      %s487 = scalar_select %p486, %s27, 3
      %s488 = smul.addr %s487, 8
      %s489 = scalar_lea.vmem %s5, %s488
      %p490 = scmp.lt.s32.totalorder %s27, 3
      %s491 = scalar_select %p490, %s27, 3
      %s492 = smul.addr %s491, 8
      %s493 = scalar_lea.vmem %s6, %s492
      %p494 = scmp.lt.s32.totalorder %s26, 1
      %s495 = scalar_select %p494, %s26, 1
      %p496 = scmp.lt.s32.totalorder %s28, 3
      %s497 = scalar_select %p496, %s28, 3
      %p498 = scmp.lt.s32.totalorder %s27, 3
      %s499 = scalar_select %p498, %s27, 3
      %s500 = smul.addr %s497, 4
      %s501 = sadd.s32 %s499, %s500
      %s502 = smul.addr %s495, 16
      %s503 = sadd.s32 %s501, %s502
      %s504 = smul.addr %s503, 4
      %s505 = scalar_lea.vmem %s7, %s504
      %p506 = scmp.lt.s32.totalorder %s26, 1
      %s507 = scalar_select %p506, %s26, 1
      %p508 = scmp.lt.s32.totalorder %s28, 3
      %s509 = scalar_select %p508, %s28, 3
      %p510 = scmp.lt.s32.totalorder %s27, 3
      %s511 = scalar_select %p510, %s27, 3
      %s512 = smul.addr %s509, 4
      %s513 = sadd.s32 %s511, %s512
      %s514 = smul.addr %s507, 16
      %s515 = sadd.s32 %s513, %s514
      %s516 = smul.addr %s515, 4
      %s517 = scalar_lea.vmem %s8, %s516
      %p518 = scmp.lt.s32.totalorder %s26, 1
      %s519 = scalar_select %p518, %s26, 1
      %p520 = scmp.lt.s32.totalorder %s28, 3
      %s521 = scalar_select %p520, %s28, 3
      %p522 = scmp.lt.s32.totalorder %s27, 3
      %s523 = scalar_select %p522, %s27, 3
      %s524 = smul.addr %s521, 4
      %s525 = sadd.s32 %s523, %s524
      %s526 = smul.addr %s519, 16
      %s527 = sadd.s32 %s525, %s526
      %s528 = smul.addr %s527, 4
      %s529 = scalar_lea.vmem %s9, %s528
      %p531 = scmp.eq.s32.totalorder %s28, 0
      // Predicated region
      $region49: #{tpu_custom_call.1} parent=47 // pred_check
        %p532 = pneg %p531
      $region50: #{tpu_custom_call.1} parent=47 // pred_check_branch
        %534 = sbr.rel (%p532) target = $region52
      $region51: #{tpu_custom_call.1} parent=47 // pred_region
        %v535 = vld [vmem:[%s472] sm:$0xff]
        %v536 = vld [vmem:[%s1] sm:$0x1]
        %v537 = vmul.f32 %v535, %v535
        %vm538 = vcmask 261120
        %v539 = vsel %vm538, %v537, 0.0
        %540 = vadd.xlane.f32.xlu0 %v539
        %v541 = vpop.xlane.xlu0 %540
        %v542 = vrcp.pop 32.0
        %v543 = vmul.f32 %v541, %v542
        %v544 = vadd.f32 %v543, 1e-06
        %v545 = vrsqrt.pop %v544
        %v546 = vmul.f32 %v535, %v545
        %v548 = vlaneseq
        %v549 = vshrl.u32 %v548, 7
        %v550 = vsub.s32 0, %v549
        %v551 = vrot.slane %v536, %v550
        %v553 = vmul.f32 %v546, %v551
        %v554 = vpack.c.bf16 %v553, %v553
        %vm555 = vcmask 257024
        %556 = vst.msk [vmem:[#allocation2] sm:$0xf] %vm555, %v554
      $region52: #{tpu_custom_call.1} parent=47 // pred_fallthru
        _
      %v557 = vld [vmem:[#allocation2] sm:$0xf]
      %v558 = vld [vmem:[%s477] sm:$0xf]
      %v559 = vld [vmem:[%s477 + $0x4] sm:$0xf]
      %v560 = vld [vmem:[%s477 + $0x8] sm:$0xf]
      %v561 = vld [vmem:[%s477 + $0xc] sm:$0xf]
      %v566 = vunpack.c.l.b16 %v558
      %v567 = vunpack.c.l.b16 %v559
      %v568 = vunpack.c.l.b16 %v560
      %v569 = vunpack.c.l.b16 %v561
      %v570 = vpack.c.b16 %v567, %v566
      %v571 = vpack.c.b16 %v569, %v568
      %vm574 = vcmask 261120
      %v576 = vsel %vm574, %v557, 0
      %578 = vmatprep.subr.bf16.mxu0 0
      %579 = vmatpush1.bf16.msra.mxu0 0
      %580 = vmatprep.subr.bf16.mxu0 0
      %581 = vmatpush1.bf16.msra.mxu0 0
      %582 = vmatprep.subr.bf16.mxu0 0
      %583 = vmatpush1.bf16.msra.mxu0 0
      %584 = vmatprep.subr.bf16.mxu0 0
      %585 = vmatpush1.bf16.msra.mxu0 0
      %586 = vmatprep.subr.bf16.mxu0 0
      %587 = vmatpush1.bf16.msra.mxu0 0
      %588 = vmatprep.subr.bf16.mxu0 0
      %589 = vmatpush1.bf16.msra.mxu0 0
      %590 = vmatprep.subr.bf16.mxu0 0
      %591 = vmatpush1.bf16.msra.mxu0 %v571
      %592 = vmatprep.subr.bf16.mxu0 0
      %593 = vmatpush1.bf16.msra.mxu0 %v570
      %594 = vmatprep.subr.bf16.mxu0 0
      %595 = vmatpush2.bf16.msra.mxu0 0
      %596 = vmatprep.subr.bf16.mxu0 0
      %597 = vmatpush2.bf16.msra.mxu0 0
      %598 = vmatprep.subr.bf16.mxu0 0
      %599 = vmatpush2.bf16.msra.mxu0 0
      %600 = vmatprep.subr.bf16.mxu0 0
      %601 = vmatpush2.bf16.msra.mxu0 0
      %602 = vmatprep.subr.bf16.mxu0 0
      %603 = vmatpush2.bf16.msra.mxu0 0
      %604 = vmatprep.subr.bf16.mxu0 0
      %605 = vmatpush2.bf16.msra.mxu0 0
      %606 = vmatprep.subr.bf16.mxu0 0
      %607 = vmatpush2.bf16.msra.mxu0 0
      %608 = vmatprep.subr.bf16.mxu0 0
      %609 = vmatpush2.bf16.msra.mxu0 0
      %610 = vmatprep.mubr.bf16.mxu0 0
      %611 = vmatmul.mubr.bf16.gmra.mxu0 %v576
      %v612 = vpop.f32.mrf.mxu0
      %v613 = vadd.f32 0.0, %v612
      %v614 = vpop.f32.mrf.mxu0
      %v615 = vpop.f32.mrf.mxu0
      %v616 = vpop.f32.mrf.mxu0
      %617 = vdwg.mxu0
      %v618 = vld [vmem:[%s481] sm:$0xff]
      %v619 = vmul.f32 %v613, %v618
      %621 = vrot.lane.b32.xlu0 %v613, 124
      %v622 = vpop.permute.xlu0 %621
      %624 = vrot.lane.b32.xlu0 %v613, 4
      %v625 = vpop.permute.xlu0 %624
      %vm627 = vcmask 31744
      %v628 = vsel %vm627, %v622, %v625
      %v629 = vld [vmem:[%s485] sm:$0xff]
      %v630 = vmul.f32 %v628, %v629
      %v631 = vadd.f32 %v619, %v630
      %v632 = vld [vmem:[%s489] sm:$0xff]
      %634 = vrot.lane.b32.xlu0 %v632, 8
      %v635 = vpop.permute.xlu0 %634
      %v637 = vmul.f32 %v613, %v635
      %638 = vrot.lane.b32.xlu0 %v613, 116
      %v639 = vpop.permute.xlu0 %638
      %v641 = vsel %vm627, %v639, %v622
      %v642 = vld [vmem:[%s493] sm:$0xff]
      %v643 = vmul.f32 %v641, %v642
      %645 = vrot.lane.b32.xlu0 %v643, 8
      %v646 = vpop.permute.xlu0 %645
      %v648 = vadd.f32 %v637, %v646
      %v649 = vpack.c.bf16 %v631, %v631
      %vm650 = vcmask 60416
      %651 = vst.msk [vmem:[%s505] sm:$0xf] %vm650, %v649
      %v652 = vpack.c.bf16 %v648, %v648
      %v654 = vunpack.c.l.b16 %v652
      %v655 = vpack.c.b16 %v654, %v654
      %656 = vrot.lane.b32.xlu0 %v655, 120
      %v657 = vpop.permute.xlu0 %656
      %659 = vst.msk [vmem:[%s517] sm:$0xf] %vm650, %v657
      %v660 = vpack.c.bf16 %v613, %v613
      %v662 = vunpack.c.l.b16 %v660
      %v663 = vpack.c.b16 %v662, %v662
      %664 = vrot.lane.b32.xlu0 %v663, 112
      %v665 = vpop.permute.xlu0 %664
      %667 = vst.msk [vmem:[%s529] sm:$0xf] %vm650, %v665
      %p668 = scmp.lt.s32.totalorder %s26, 1
      %s669 = scalar_select %p668, %s26, 1
      %p670 = scmp.lt.s32.totalorder %s28, 3
      %s671 = scalar_select %p670, %s28, 3
      %p672 = scmp.lt.s32.totalorder %s27, 3
      %s673 = scalar_select %p672, %s27, 3
      %s674 = smul.addr %s671, 4
      %s675 = sadd.s32 %s673, %s674
      %s676 = smul.addr %s669, 16
      %s677 = sadd.s32 %s675, %s676
      %s678 = smul.addr %s677, 4
      %s679 = scalar_lea.vmem %s7, %s678
      %p680 = scmp.lt.s32.totalorder %s26, 1
      %s681 = scalar_select %p680, %s26, 1
      %p682 = scmp.lt.s32.totalorder %s28, 3
      %s683 = scalar_select %p682, %s28, 3
      %p684 = scmp.lt.s32.totalorder %s27, 3
      %s685 = scalar_select %p684, %s27, 3
      %s686 = smul.addr %s683, 4
      %s687 = sadd.s32 %s685, %s686
      %s688 = smul.addr %s681, 16
      %s689 = sadd.s32 %s687, %s688
      %s690 = smul.addr %s689, 4
      %s691 = scalar_lea.vmem %s8, %s690
      %p692 = scmp.lt.s32.totalorder %s26, 1
      %s693 = scalar_select %p692, %s26, 1
      %p694 = scmp.lt.s32.totalorder %s28, 3
      %s695 = scalar_select %p694, %s28, 3
      %p696 = scmp.lt.s32.totalorder %s27, 3
      %s697 = scalar_select %p696, %s27, 3
      %s698 = smul.addr %s695, 4
      %s699 = sadd.s32 %s697, %s698
      %s700 = smul.addr %s693, 16
      %s701 = sadd.s32 %s699, %s700
      %s702 = smul.addr %s701, 4
      %s703 = scalar_lea.vmem %s9, %s702
      // Predicated region
      $region53: #{tpu_custom_call.1} parent=47 // pred_check
        %p704 = pneg %p241
      $region54: #{tpu_custom_call.1} parent=47 // pred_check_branch
        %706 = sbr.rel (%p704) target = $region56
      $region55: #{tpu_custom_call.1} parent=47 // pred_region
        _
      $region56: #{tpu_custom_call.1} parent=47 // pred_fallthru
        _
      // Predicated region
      $region57: #{tpu_custom_call.1} parent=47 // pred_check
        %p707 = pneg %p271
      $region58: #{tpu_custom_call.1} parent=47 // pred_check_branch
        %709 = sbr.rel (%p707) target = $region60
      $region59: #{tpu_custom_call.1} parent=47 // pred_region
        _
      $region60: #{tpu_custom_call.1} parent=47 // pred_fallthru
        _
      // Predicated region
      $region61: #{tpu_custom_call.1} parent=47 // pred_check
        %p710 = pneg %p301
      $region62: #{tpu_custom_call.1} parent=47 // pred_check_branch
        %712 = sbr.rel (%p710) target = $region64
      $region63: #{tpu_custom_call.1} parent=47 // pred_region
        _
      $region64: #{tpu_custom_call.1} parent=47 // pred_fallthru
        _
    $region48: #{tpu_custom_call.1} parent=5 // pred_fallthru
      _
    %p713 = scmp.le.s32.totalorder 2, %s16
    // Predicated region
    $region65: #{tpu_custom_call.1} parent=5 // pred_check
      %p714 = pneg %p713
    $region66: #{tpu_custom_call.1} parent=5 // pred_check_branch
      %716 = sbr.rel (%p714) target = $region68
    $region67: #{tpu_custom_call.1} parent=5 // pred_region
      %s717 = ssub.s32 %s16, 2
      // Predicated region
      $region69: #{tpu_custom_call.1} parent=67 // pred_check
        %p718 = pneg %p247
      $region70: #{tpu_custom_call.1} parent=67 // pred_check_branch
        %720 = sbr.rel (%p718) target = $region72
      $region71: #{tpu_custom_call.1} parent=67 // pred_region
        %p721 = scmp.lt.s32.totalorder %s29, 1
        %s722 = scalar_select %p721, %s29, 1
        %p723 = scmp.lt.s32.totalorder %s31, 3
        %s724 = scalar_select %p723, %s31, 3
        %p725 = scmp.lt.s32.totalorder %s30, 3
        %s726 = scalar_select %p725, %s30, 3
        %s727 = smul.addr %s724, 4
        %s728 = sadd.s32 %s726, %s727
        %s729 = smul.addr %s722, 16
        %s730 = sadd.s32 %s728, %s729
        %s731 = smul.addr %s730, 4
        %s732 = scalar_lea.vmem %s7, %s731
      $region72: #{tpu_custom_call.1} parent=67 // pred_fallthru
        _
      // Predicated region
      $region73: #{tpu_custom_call.1} parent=67 // pred_check
        %p733 = pneg %p277
      $region74: #{tpu_custom_call.1} parent=67 // pred_check_branch
        %735 = sbr.rel (%p733) target = $region76
      $region75: #{tpu_custom_call.1} parent=67 // pred_region
        %p736 = scmp.lt.s32.totalorder %s29, 1
        %s737 = scalar_select %p736, %s29, 1
        %p738 = scmp.lt.s32.totalorder %s31, 3
        %s739 = scalar_select %p738, %s31, 3
        %p740 = scmp.lt.s32.totalorder %s30, 3
        %s741 = scalar_select %p740, %s30, 3
        %s742 = smul.addr %s739, 4
        %s743 = sadd.s32 %s741, %s742
        %s744 = smul.addr %s737, 16
        %s745 = sadd.s32 %s743, %s744
        %s746 = smul.addr %s745, 4
        %s747 = scalar_lea.vmem %s8, %s746
      $region76: #{tpu_custom_call.1} parent=67 // pred_fallthru
        _
      // Predicated region
      $region77: #{tpu_custom_call.1} parent=67 // pred_check
        %p748 = pneg %p307
      $region78: #{tpu_custom_call.1} parent=67 // pred_check_branch
        %750 = sbr.rel (%p748) target = $region80
      $region79: #{tpu_custom_call.1} parent=67 // pred_region
        %p751 = scmp.lt.s32.totalorder %s29, 1
        %s752 = scalar_select %p751, %s29, 1
        %p753 = scmp.lt.s32.totalorder %s31, 3
        %s754 = scalar_select %p753, %s31, 3
        %p755 = scmp.lt.s32.totalorder %s30, 3
        %s756 = scalar_select %p755, %s30, 3
        %s757 = smul.addr %s754, 4
        %s758 = sadd.s32 %s756, %s757
        %s759 = smul.addr %s752, 16
        %s760 = sadd.s32 %s758, %s759
        %s761 = smul.addr %s760, 4
        %s762 = scalar_lea.vmem %s9, %s761
      $region80: #{tpu_custom_call.1} parent=67 // pred_fallthru
        _
    $region68: #{tpu_custom_call.1} parent=5 // pred_fallthru
      _
  $region6: #{tpu_custom_call.1} parent=0 // loop_footer
    %s20 = sadd.s32 1, %s16
  $region7: #{tpu_custom_call.1} parent=0 // loop_footer_branch
    %15 = sbr.rel target = $region3
  $region8: #{tpu_custom_call.1} parent=0 // loop_exit
    _

</llo_original>
